<compile_context>
chip_gen: v5e
topology: v5e:2x2
jax: 0.10.0
libtpu: 0.0.40
codegen_flags: <defaults>
</compile_context>

<pallas_src>
import jax
import jax.numpy as jnp
from jax.experimental import pallas as pl
from jax.experimental.pallas import tpu as pltpu


def _copy_kernel(x_ref, o_ref):
    # Single full-slab identity copy — the only data movement a contiguous
    # .view could ever imply when materialised as a new buffer.
    o_ref[...] = x_ref[...]


def view_add_module(x86, x72):
    """Replicates M.forward(x86, x72).

    x86: Python tuple, e.g. (1, 384)
    x72: jnp array of shape x86 + (256,), i.e. (1, 384, 256)
    returns: array of shape x86 + (4, 64) == (1, 384, 4, 64)
    """
    # x87 = operator.add(x86, (4, 64)) -- pure tuple concatenation (Python glue).
    x87 = tuple(x86) + (4, 64)

    B, S, H = x72.shape
    assert B == 1 and H == 256, "module fixes x72 to shape (1, 384, 256)"

    # Squeeze the batch dim (contiguous, metadata-only). (S, H) = (384, 256) is
    # divisible by (8, 128), so the whole slab is a legal single block.
    x2d = x72.reshape(S, H)

    out2d = pl.pallas_call(
        _copy_kernel,
        out_shape=jax.ShapeDtypeStruct((S, H), x72.dtype),
        grid=(1,),  # single step: one contiguous DMA in, one out
        in_specs=[pl.BlockSpec((S, H), lambda i: (0, 0))],
        out_specs=pl.BlockSpec((S, H), lambda i: (0, 0)),
        compiler_params=pltpu.CompilerParams(
            # Overhead-bound 384 KiB copy: keep it single-step / single-core.
            dimension_semantics=("arbitrary",)
        ),
    )(x2d)

    # x88 = x72.view(x87): contiguous reshape of the copied buffer (metadata only).
    return out2d.reshape(x87)


if __name__ == "__main__":
    key = jax.random.PRNGKey(0)
    # Shapes implied by the module: x72 ~ [1, 384, 256], x86 = (1, 384)
    x72 = jax.random.normal(key, (1, 384, 256), dtype=jnp.float32)
    x86 = (1, 384)

    out = view_add_module(x86, x72)
    out = jax.block_until_ready(out)

    # Sanity checks against the reference semantics of torch .view
    assert out.shape == (1, 384, 4, 64), out.shape
    ref = x72.reshape(1, 384, 4, 64)
    assert jnp.array_equal(out, ref), "kernel output mismatch"

    print("KERNEL_OK")
</pallas_src>

<mosaic_0001>
module attributes {stable_mosaic.version = 11 : i64} {
  func.func @_copy_kernel(%arg0: i32, %arg1: memref<384x256xf32, #tpu.memory_space<vmem>>, %arg2: memref<384x256xf32, #tpu.memory_space<vmem>>) attributes {dimension_semantics = [#tpu.dimension_semantics<arbitrary>], iteration_bounds = array<i64: 1>, scalar_prefetch = 0 : i64, scratch_operands = 0 : i64, tpu.core_type = #tpu.core_type<tc>, window_params = [{pipeline_mode = #tpu.pipeline_mode<synchronous>, transform_indices = @transform_0, window_bounds = array<i64: 384, 256>}, {pipeline_mode = #tpu.pipeline_mode<synchronous>, transform_indices = @transform_1, window_bounds = array<i64: 384, 256>}]} {
    %c0 = arith.constant 0 : index
    %c0_0 = arith.constant 0 : index
    %0 = vector.load %arg1[%c0, %c0_0] : memref<384x256xf32, #tpu.memory_space<vmem>>, vector<384x256xf32>
    %c0_1 = arith.constant 0 : index
    %c0_2 = arith.constant 0 : index
    %1 = vector.load %arg2[%c0_1, %c0_2] : memref<384x256xf32, #tpu.memory_space<vmem>>, vector<384x256xf32>
    tpu.vector_store %arg2[%c0_1, %c0_2], %0 {strides = array<i32>} : memref<384x256xf32, #tpu.memory_space<vmem>>, vector<384x256xf32>,
    return
  }
  func.func @transform_0(%arg0: i32) -> (i32, i32) {
    %c0_i32 = arith.constant 0 : i32
    %c0_i32_0 = arith.constant 0 : i32
    %c0_i32_1 = arith.constant 0 : i32
    return %c0_i32, %c0_i32_0 : i32, i32
  }
  func.func @transform_1(%arg0: i32) -> (i32, i32) {
    %c0_i32 = arith.constant 0 : i32
    %c0_i32_0 = arith.constant 0 : i32
    %c0_i32_1 = arith.constant 0 : i32
    return %c0_i32, %c0_i32_0 : i32, i32
  }
}

</mosaic_0001>

<llo_original>
// kernel: tpu_custom_call.1
$region0: #{tpu_custom_call.1}
  #allocation0 [shape = 'u32[]', space=smem, size = 0x4, offset = 0x4, fixed_abs, tag = 'smem constant byte address 0x4 - core index']
  #allocation1 [shape = 'u32[72,128]{1,0:T(1,128)}', space=vmem, size = 0x9000, scoped, tag = 'internal scratch']
  %s0 = inlined_call_operand.hbm [shape: f32[384,256], index: 0, kind: input, shape index: {}]
  %s1 = inlined_call_operand.hbm [shape: f32[384,256], index: 1, kind: output, shape index: {}]
  %s2 = sld [smem:[#allocation0]]
  $region18: #{tpu_custom_call.1} parent=0
    _
  %s4 = ssub.s32 1, %s2
  %s5 = scalar_select 0, %s4, %s2
  $region1: #{tpu_custom_call.1} parent=0
    #allocation2 [shape = 'u8[393216]{0}', space=vmem, size = 0x60000, scoped, tag = 'input window, operand 0, single buffered']
    #allocation3 [shape = 's32[1]{0}', space=sflag, size = 0x4, scoped, tag = 'scoped memory for tpu_custom_call.1']
    #allocation4 [shape = 's32[1]{0}', space=sflag, size = 0x4, scoped, tag = 'scoped memory for tpu_custom_call.1']
    #allocation5 [shape = 'u8[393216]{0}', space=vmem, size = 0x60000, scoped, tag = 'output window, operand 0, single buffered']
    %6 = vsyncpa [#allocation3], 0
    %7 = vsyncpa [#allocation4], 0
    // Predicated region
    $region2: #{tpu_custom_call.1} parent=1 // pred_check
      _
    $region3: #{tpu_custom_call.1} parent=1 // pred_check_branch
      %9 = sbr.rel (0) target = $region5
    $region4: #{tpu_custom_call.1} parent=1 // pred_region
      %11 = vsyncadd [#allocation3], 0
      %s12 = sshll.u32 %s0, 4
      %s13 = int_to_ptr.hbm [resolvable:$true] %s12
      %s14 = sshll.u32 [#allocation2], 4
      %s15 = int_to_ptr.vmem [resolvable:$true] %s14
      %20 = dma.hbm_to_vmem [thread:$0]  %s13, 12288, %s15, [#allocation3], 256, 256, 16
    $region5: #{tpu_custom_call.1} parent=1 // pred_fallthru
      _
    // Predicated region
    $region6: #{tpu_custom_call.1} parent=1 // pred_check
      _
    $region7: #{tpu_custom_call.1} parent=1 // pred_check_branch
      %22 = sbr.rel (0) target = $region9
    $region8: #{tpu_custom_call.1} parent=1 // pred_region
      %24 = dma.done [#allocation3], 12288
    $region9: #{tpu_custom_call.1} parent=1 // pred_fallthru
      _
    %v25 = vld [vmem:[#allocation2] sm:$0xff]
    %v26 = vld [vmem:[#allocation2 + $0x8] sm:$0xff]
    %v27 = vld [vmem:[#allocation2 + $0x10] sm:$0xff]
    %v28 = vld [vmem:[#allocation2 + $0x18] sm:$0xff]
    %v29 = vld [vmem:[#allocation2 + $0x20] sm:$0xff]
    %v30 = vld [vmem:[#allocation2 + $0x28] sm:$0xff]
    %v31 = vld [vmem:[#allocation2 + $0x30] sm:$0xff]
    %v32 = vld [vmem:[#allocation2 + $0x38] sm:$0xff]
    %v33 = vld [vmem:[#allocation2 + $0x40] sm:$0xff]
    %v34 = vld [vmem:[#allocation2 + $0x48] sm:$0xff]
    %v35 = vld [vmem:[#allocation2 + $0x50] sm:$0xff]
    %v36 = vld [vmem:[#allocation2 + $0x58] sm:$0xff]
    %v37 = vld [vmem:[#allocation2 + $0x60] sm:$0xff]
    %v38 = vld [vmem:[#allocation2 + $0x68] sm:$0xff]
    %v39 = vld [vmem:[#allocation2 + $0x70] sm:$0xff]
    %v40 = vld [vmem:[#allocation2 + $0x78] sm:$0xff]
    %v41 = vld [vmem:[#allocation2 + $0x80] sm:$0xff]
    %v42 = vld [vmem:[#allocation2 + $0x88] sm:$0xff]
    %v43 = vld [vmem:[#allocation2 + $0x90] sm:$0xff]
    %v44 = vld [vmem:[#allocation2 + $0x98] sm:$0xff]
    %v45 = vld [vmem:[#allocation2 + $0xa0] sm:$0xff]
    %v46 = vld [vmem:[#allocation2 + $0xa8] sm:$0xff]
    %v47 = vld [vmem:[#allocation2 + $0xb0] sm:$0xff]
    %v48 = vld [vmem:[#allocation2 + $0xb8] sm:$0xff]
    %v49 = vld [vmem:[#allocation2 + $0xc0] sm:$0xff]
    %v50 = vld [vmem:[#allocation2 + $0xc8] sm:$0xff]
    %v51 = vld [vmem:[#allocation2 + $0xd0] sm:$0xff]
    %v52 = vld [vmem:[#allocation2 + $0xd8] sm:$0xff]
    %v53 = vld [vmem:[#allocation2 + $0xe0] sm:$0xff]
    %v54 = vld [vmem:[#allocation2 + $0xe8] sm:$0xff]
    %v55 = vld [vmem:[#allocation2 + $0xf0] sm:$0xff]
    %v56 = vld [vmem:[#allocation2 + $0xf8] sm:$0xff]
    %v57 = vld [vmem:[#allocation2 + $0x100] sm:$0xff]
    %v58 = vld [vmem:[#allocation2 + $0x108] sm:$0xff]
    %v59 = vld [vmem:[#allocation2 + $0x110] sm:$0xff]
    %v60 = vld [vmem:[#allocation2 + $0x118] sm:$0xff]
    %v61 = vld [vmem:[#allocation2 + $0x120] sm:$0xff]
    %v62 = vld [vmem:[#allocation2 + $0x128] sm:$0xff]
    %v63 = vld [vmem:[#allocation2 + $0x130] sm:$0xff]
    %v64 = vld [vmem:[#allocation2 + $0x138] sm:$0xff]
    %v65 = vld [vmem:[#allocation2 + $0x140] sm:$0xff]
    %v66 = vld [vmem:[#allocation2 + $0x148] sm:$0xff]
    %v67 = vld [vmem:[#allocation2 + $0x150] sm:$0xff]
    %v68 = vld [vmem:[#allocation2 + $0x158] sm:$0xff]
    %v69 = vld [vmem:[#allocation2 + $0x160] sm:$0xff]
    %v70 = vld [vmem:[#allocation2 + $0x168] sm:$0xff]
    %v71 = vld [vmem:[#allocation2 + $0x170] sm:$0xff]
    %v72 = vld [vmem:[#allocation2 + $0x178] sm:$0xff]
    %v73 = vld [vmem:[#allocation2 + $0x180] sm:$0xff]
    %v74 = vld [vmem:[#allocation2 + $0x188] sm:$0xff]
    %v75 = vld [vmem:[#allocation2 + $0x190] sm:$0xff]
    %v76 = vld [vmem:[#allocation2 + $0x198] sm:$0xff]
    %v77 = vld [vmem:[#allocation2 + $0x1a0] sm:$0xff]
    %v78 = vld [vmem:[#allocation2 + $0x1a8] sm:$0xff]
    %v79 = vld [vmem:[#allocation2 + $0x1b0] sm:$0xff]
    %v80 = vld [vmem:[#allocation2 + $0x1b8] sm:$0xff]
    %v81 = vld [vmem:[#allocation2 + $0x1c0] sm:$0xff]
    %v82 = vld [vmem:[#allocation2 + $0x1c8] sm:$0xff]
    %v83 = vld [vmem:[#allocation2 + $0x1d0] sm:$0xff]
    %v84 = vld [vmem:[#allocation2 + $0x1d8] sm:$0xff]
    %v85 = vld [vmem:[#allocation2 + $0x1e0] sm:$0xff]
    %v86 = vld [vmem:[#allocation2 + $0x1e8] sm:$0xff]
    %v87 = vld [vmem:[#allocation2 + $0x1f0] sm:$0xff]
    %v88 = vld [vmem:[#allocation2 + $0x1f8] sm:$0xff]
    %v89 = vld [vmem:[#allocation2 + $0x200] sm:$0xff]
    %v90 = vld [vmem:[#allocation2 + $0x208] sm:$0xff]
    %v91 = vld [vmem:[#allocation2 + $0x210] sm:$0xff]
    %v92 = vld [vmem:[#allocation2 + $0x218] sm:$0xff]
    %v93 = vld [vmem:[#allocation2 + $0x220] sm:$0xff]
    %v94 = vld [vmem:[#allocation2 + $0x228] sm:$0xff]
    %v95 = vld [vmem:[#allocation2 + $0x230] sm:$0xff]
    %v96 = vld [vmem:[#allocation2 + $0x238] sm:$0xff]
    %v97 = vld [vmem:[#allocation2 + $0x240] sm:$0xff]
    %v98 = vld [vmem:[#allocation2 + $0x248] sm:$0xff]
    %v99 = vld [vmem:[#allocation2 + $0x250] sm:$0xff]
    %v100 = vld [vmem:[#allocation2 + $0x258] sm:$0xff]
    %v101 = vld [vmem:[#allocation2 + $0x260] sm:$0xff]
    %v102 = vld [vmem:[#allocation2 + $0x268] sm:$0xff]
    %v103 = vld [vmem:[#allocation2 + $0x270] sm:$0xff]
    %v104 = vld [vmem:[#allocation2 + $0x278] sm:$0xff]
    %v105 = vld [vmem:[#allocation2 + $0x280] sm:$0xff]
    %v106 = vld [vmem:[#allocation2 + $0x288] sm:$0xff]
    %v107 = vld [vmem:[#allocation2 + $0x290] sm:$0xff]
    %v108 = vld [vmem:[#allocation2 + $0x298] sm:$0xff]
    %v109 = vld [vmem:[#allocation2 + $0x2a0] sm:$0xff]
    %v110 = vld [vmem:[#allocation2 + $0x2a8] sm:$0xff]
    %v111 = vld [vmem:[#allocation2 + $0x2b0] sm:$0xff]
    %v112 = vld [vmem:[#allocation2 + $0x2b8] sm:$0xff]
    %v113 = vld [vmem:[#allocation2 + $0x2c0] sm:$0xff]
    %v114 = vld [vmem:[#allocation2 + $0x2c8] sm:$0xff]
    %v115 = vld [vmem:[#allocation2 + $0x2d0] sm:$0xff]
    %v116 = vld [vmem:[#allocation2 + $0x2d8] sm:$0xff]
    %v117 = vld [vmem:[#allocation2 + $0x2e0] sm:$0xff]
    %v118 = vld [vmem:[#allocation2 + $0x2e8] sm:$0xff]
    %v119 = vld [vmem:[#allocation2 + $0x2f0] sm:$0xff]
    %v120 = vld [vmem:[#allocation2 + $0x2f8] sm:$0xff]
    %121 = vst [vmem:[#allocation5] sm:$0xff] %v25
    %122 = vst [vmem:[#allocation5 + $0x8] sm:$0xff] %v26
    %123 = vst [vmem:[#allocation5 + $0x10] sm:$0xff] %v27
    %124 = vst [vmem:[#allocation5 + $0x18] sm:$0xff] %v28
    %125 = vst [vmem:[#allocation5 + $0x20] sm:$0xff] %v29
    %126 = vst [vmem:[#allocation5 + $0x28] sm:$0xff] %v30
    %127 = vst [vmem:[#allocation5 + $0x30] sm:$0xff] %v31
    %128 = vst [vmem:[#allocation5 + $0x38] sm:$0xff] %v32
    %129 = vst [vmem:[#allocation5 + $0x40] sm:$0xff] %v33
    %130 = vst [vmem:[#allocation5 + $0x48] sm:$0xff] %v34
    %131 = vst [vmem:[#allocation5 + $0x50] sm:$0xff] %v35
    %132 = vst [vmem:[#allocation5 + $0x58] sm:$0xff] %v36
    %133 = vst [vmem:[#allocation5 + $0x60] sm:$0xff] %v37
    %134 = vst [vmem:[#allocation5 + $0x68] sm:$0xff] %v38
    %135 = vst [vmem:[#allocation5 + $0x70] sm:$0xff] %v39
    %136 = vst [vmem:[#allocation5 + $0x78] sm:$0xff] %v40
    %137 = vst [vmem:[#allocation5 + $0x80] sm:$0xff] %v41
    %138 = vst [vmem:[#allocation5 + $0x88] sm:$0xff] %v42
    %139 = vst [vmem:[#allocation5 + $0x90] sm:$0xff] %v43
    %140 = vst [vmem:[#allocation5 + $0x98] sm:$0xff] %v44
    %141 = vst [vmem:[#allocation5 + $0xa0] sm:$0xff] %v45
    %142 = vst [vmem:[#allocation5 + $0xa8] sm:$0xff] %v46
    %143 = vst [vmem:[#allocation5 + $0xb0] sm:$0xff] %v47
    %144 = vst [vmem:[#allocation5 + $0xb8] sm:$0xff] %v48
    %145 = vst [vmem:[#allocation5 + $0xc0] sm:$0xff] %v49
    %146 = vst [vmem:[#allocation5 + $0xc8] sm:$0xff] %v50
    %147 = vst [vmem:[#allocation5 + $0xd0] sm:$0xff] %v51
    %148 = vst [vmem:[#allocation5 + $0xd8] sm:$0xff] %v52
    %149 = vst [vmem:[#allocation5 + $0xe0] sm:$0xff] %v53
    %150 = vst [vmem:[#allocation5 + $0xe8] sm:$0xff] %v54
    %151 = vst [vmem:[#allocation5 + $0xf0] sm:$0xff] %v55
    %152 = vst [vmem:[#allocation5 + $0xf8] sm:$0xff] %v56
    %153 = vst [vmem:[#allocation5 + $0x100] sm:$0xff] %v57
    %154 = vst [vmem:[#allocation5 + $0x108] sm:$0xff] %v58
    %155 = vst [vmem:[#allocation5 + $0x110] sm:$0xff] %v59
    %156 = vst [vmem:[#allocation5 + $0x118] sm:$0xff] %v60
    %157 = vst [vmem:[#allocation5 + $0x120] sm:$0xff] %v61
    %158 = vst [vmem:[#allocation5 + $0x128] sm:$0xff] %v62
    %159 = vst [vmem:[#allocation5 + $0x130] sm:$0xff] %v63
    %160 = vst [vmem:[#allocation5 + $0x138] sm:$0xff] %v64
    %161 = vst [vmem:[#allocation5 + $0x140] sm:$0xff] %v65
    %162 = vst [vmem:[#allocation5 + $0x148] sm:$0xff] %v66
    %163 = vst [vmem:[#allocation5 + $0x150] sm:$0xff] %v67
    %164 = vst [vmem:[#allocation5 + $0x158] sm:$0xff] %v68
    %165 = vst [vmem:[#allocation5 + $0x160] sm:$0xff] %v69
    %166 = vst [vmem:[#allocation5 + $0x168] sm:$0xff] %v70
    %167 = vst [vmem:[#allocation5 + $0x170] sm:$0xff] %v71
    %168 = vst [vmem:[#allocation5 + $0x178] sm:$0xff] %v72
    %169 = vst [vmem:[#allocation5 + $0x180] sm:$0xff] %v73
    %170 = vst [vmem:[#allocation5 + $0x188] sm:$0xff] %v74
    %171 = vst [vmem:[#allocation5 + $0x190] sm:$0xff] %v75
    %172 = vst [vmem:[#allocation5 + $0x198] sm:$0xff] %v76
    %173 = vst [vmem:[#allocation5 + $0x1a0] sm:$0xff] %v77
    %174 = vst [vmem:[#allocation5 + $0x1a8] sm:$0xff] %v78
    %175 = vst [vmem:[#allocation5 + $0x1b0] sm:$0xff] %v79
    %176 = vst [vmem:[#allocation5 + $0x1b8] sm:$0xff] %v80
    %177 = vst [vmem:[#allocation5 + $0x1c0] sm:$0xff] %v81
    %178 = vst [vmem:[#allocation5 + $0x1c8] sm:$0xff] %v82
    %179 = vst [vmem:[#allocation5 + $0x1d0] sm:$0xff] %v83
    %180 = vst [vmem:[#allocation5 + $0x1d8] sm:$0xff] %v84
    %181 = vst [vmem:[#allocation5 + $0x1e0] sm:$0xff] %v85
    %182 = vst [vmem:[#allocation5 + $0x1e8] sm:$0xff] %v86
    %183 = vst [vmem:[#allocation5 + $0x1f0] sm:$0xff] %v87
    %184 = vst [vmem:[#allocation5 + $0x1f8] sm:$0xff] %v88
    %185 = vst [vmem:[#allocation5 + $0x200] sm:$0xff] %v89
    %186 = vst [vmem:[#allocation5 + $0x208] sm:$0xff] %v90
    %187 = vst [vmem:[#allocation5 + $0x210] sm:$0xff] %v91
    %188 = vst [vmem:[#allocation5 + $0x218] sm:$0xff] %v92
    %189 = vst [vmem:[#allocation5 + $0x220] sm:$0xff] %v93
    %190 = vst [vmem:[#allocation5 + $0x228] sm:$0xff] %v94
    %191 = vst [vmem:[#allocation5 + $0x230] sm:$0xff] %v95
    %192 = vst [vmem:[#allocation5 + $0x238] sm:$0xff] %v96
    %193 = vst [vmem:[#allocation5 + $0x240] sm:$0xff] %v97
    %194 = vst [vmem:[#allocation5 + $0x248] sm:$0xff] %v98
    %195 = vst [vmem:[#allocation5 + $0x250] sm:$0xff] %v99
    %196 = vst [vmem:[#allocation5 + $0x258] sm:$0xff] %v100
    %197 = vst [vmem:[#allocation5 + $0x260] sm:$0xff] %v101
    %198 = vst [vmem:[#allocation5 + $0x268] sm:$0xff] %v102
    %199 = vst [vmem:[#allocation5 + $0x270] sm:$0xff] %v103
    %200 = vst [vmem:[#allocation5 + $0x278] sm:$0xff] %v104
    %201 = vst [vmem:[#allocation5 + $0x280] sm:$0xff] %v105
    %202 = vst [vmem:[#allocation5 + $0x288] sm:$0xff] %v106
    %203 = vst [vmem:[#allocation5 + $0x290] sm:$0xff] %v107
    %204 = vst [vmem:[#allocation5 + $0x298] sm:$0xff] %v108
    %205 = vst [vmem:[#allocation5 + $0x2a0] sm:$0xff] %v109
    %206 = vst [vmem:[#allocation5 + $0x2a8] sm:$0xff] %v110
    %207 = vst [vmem:[#allocation5 + $0x2b0] sm:$0xff] %v111
    %208 = vst [vmem:[#allocation5 + $0x2b8] sm:$0xff] %v112
    %209 = vst [vmem:[#allocation5 + $0x2c0] sm:$0xff] %v113
    %210 = vst [vmem:[#allocation5 + $0x2c8] sm:$0xff] %v114
    %211 = vst [vmem:[#allocation5 + $0x2d0] sm:$0xff] %v115
    %212 = vst [vmem:[#allocation5 + $0x2d8] sm:$0xff] %v116
    %213 = vst [vmem:[#allocation5 + $0x2e0] sm:$0xff] %v117
    %214 = vst [vmem:[#allocation5 + $0x2e8] sm:$0xff] %v118
    %215 = vst [vmem:[#allocation5 + $0x2f0] sm:$0xff] %v119
    %216 = vst [vmem:[#allocation5 + $0x2f8] sm:$0xff] %v120
    // Predicated region
    $region10: #{tpu_custom_call.1} parent=1 // pred_check
      _
    $region11: #{tpu_custom_call.1} parent=1 // pred_check_branch
      %218 = sbr.rel (0) target = $region13
    $region12: #{tpu_custom_call.1} parent=1 // pred_region
      %220 = vsyncadd [#allocation4], 0
      %s221 = sshll.u32 [#allocation5], 4
      %s222 = int_to_ptr.vmem [resolvable:$true] %s221
      %s223 = sshll.u32 %s1, 4
      %s224 = int_to_ptr.hbm [resolvable:$true] %s223
      %229 = dma.vmem_to_hbm [thread:$0]  %s222, 12288, %s224, [#allocation4], 256, 256, 16
    $region13: #{tpu_custom_call.1} parent=1 // pred_fallthru
      _
    // Predicated region
    $region14: #{tpu_custom_call.1} parent=1 // pred_check
      _
    $region15: #{tpu_custom_call.1} parent=1 // pred_check_branch
      %231 = sbr.rel (0) target = $region17
    $region16: #{tpu_custom_call.1} parent=1 // pred_region
      %233 = dma.done [#allocation4], 12288
    $region17: #{tpu_custom_call.1} parent=1 // pred_fallthru
      _
    %234 = vsyncpa [#allocation3], 1
    %235 = vsyncpa [#allocation4], 1

</llo_original>
